<compile_context>
chip_gen: v7x
topology: tpu7x:2x2x1
jax: 0.10.0
libtpu: 0.0.40
codegen_flags: <defaults>
</compile_context>

<pallas_src>
import numpy as np
import jax
import jax.numpy as jnp
from jax.experimental import pallas as pl
from jax.experimental.pallas import tpu as pltpu


# ---------------------------------------------------------------- kernel ----
def _critic_kernel(state_ref, action_ref,
                   w1_ref, b1_ref,
                   convm_ref,
                   w2_ref, b2_ref,
                   wa_ref, ba_ref,
                   wsa_s_ref, wsa_a_ref, bsa_ref,
                   wout_ref,
                   scal_ref,            # SMEM (2,): [conv bias, out bias]
                   out_ref):
    f32, bf16 = jnp.float32, jnp.bfloat16

    # s0 = relu(ls1(state))                                        (TB, 512)
    s0 = jnp.maximum(
        jnp.dot(state_ref[...], w1_ref[...], preferred_element_type=f32)
        + b1_ref[...], 0.0)

    # s1 = relu(cs(s0)) -- Conv1d(1,1,9,s=2,p=4) as banded matmul  (TB, 256)
    s1 = jnp.maximum(
        jnp.dot(s0.astype(bf16), convm_ref[...], preferred_element_type=f32)
        + scal_ref[0], 0.0)

    # s2 = relu(ls2(s1))                                           (TB, 128)
    s2 = jnp.maximum(
        jnp.dot(s1.astype(bf16), w2_ref[...], preferred_element_type=f32)
        + b2_ref[...], 0.0)

    # a = relu(la(action))                                         (TB, 128)
    a = jnp.maximum(
        jnp.dot(action_ref[...], wa_ref[...], preferred_element_type=f32)
        + ba_ref[...], 0.0)

    # sa2 = relu(lsa(cat([s2, a], -1)))
    #     == relu(s2 @ Wsa[:, :128].T + a @ Wsa[:, 128:].T + bsa)  (TB, 128)
    sa2 = jnp.maximum(
        jnp.dot(s2.astype(bf16), wsa_s_ref[...], preferred_element_type=f32)
        + jnp.dot(a.astype(bf16), wsa_a_ref[...], preferred_element_type=f32)
        + bsa_ref[...], 0.0)

    # val = lout(sa2): N=1 matmul done as VPU mul + lane reduce    (TB, 1)
    out_ref[...] = (jnp.sum(sa2 * wout_ref[...], axis=-1, keepdims=True)
                    + scal_ref[1])


# ----------------------------------------------------------- param utils ----
def conv1d_as_matrix(w_taps, in_len, stride, pad):
    """Dense (in_len, out_len) matrix exactly equivalent to a 1-in/1-out
    channel Conv1d(k, stride, padding) (cross-correlation, like torch).
    Built with a static mask (no scatter); call once at prep time."""
    k = int(w_taps.shape[0])
    out_len = (in_len + 2 * pad - k) // stride + 1
    i = jnp.arange(in_len)[:, None]            # input position
    t = jnp.arange(out_len)[None, :]           # output position
    j = i - stride * t + pad                   # tap index connecting i -> t
    valid = (j >= 0) & (j < k)
    return jnp.where(valid, w_taps[jnp.clip(j, 0, k - 1)], 0.0).astype(jnp.float32)


def _init_linear(key, out_f, in_f):
    # torch.nn.Linear default init: U(-1/sqrt(fan_in), 1/sqrt(fan_in))
    kw, kb = jax.random.split(key)
    bound = 1.0 / np.sqrt(in_f)
    w = jax.random.uniform(kw, (out_f, in_f), jnp.float32, -bound, bound)
    b = jax.random.uniform(kb, (out_f,), jnp.float32, -bound, bound)
    return w, b


def make_critic_params(key, state_dim, action_dim):
    keys = jax.random.split(key, 6)
    w1, b1 = _init_linear(keys[0], 512, state_dim)
    # Conv1d(1, 1, 9): fan_in = 1 * 9
    kcw, kcb = jax.random.split(keys[1])
    cbound = 1.0 / np.sqrt(9.0)
    wc = jax.random.uniform(kcw, (9,), jnp.float32, -cbound, cbound)
    bc = jax.random.uniform(kcb, (1,), jnp.float32, -cbound, cbound)
    w2, b2 = _init_linear(keys[2], 128, 256)
    wa, ba = _init_linear(keys[3], 128, action_dim)
    wsa, bsa = _init_linear(keys[4], 128, 256)
    wout, bout = _init_linear(keys[5], 1, 128)
    return dict(w1=w1, b1=b1, wc=wc, bc=bc, w2=w2, b2=b2, wa=wa, ba=ba,
                wsa=wsa, bsa=bsa, wout=wout, bout=bout)


def prepare_critic_inference(params):
    """One-time packing: pre-transpose / pre-slice weights, lower the conv to
    its banded matrix, cast matmul operands to bf16.  Call once per param set
    (NOT inside the per-step forward)."""
    bf16, f32 = jnp.bfloat16, jnp.float32
    convm = conv1d_as_matrix(params["wc"].astype(f32),
                             in_len=512, stride=2, pad=4)
    wsa = params["wsa"]
    return dict(
        w1t=params["w1"].T.astype(bf16),            # (S, 512)
        b1=params["b1"][None, :].astype(f32),       # (1, 512)
        convm=convm.astype(bf16),                   # (512, 256)
        w2t=params["w2"].T.astype(bf16),            # (256, 128)
        b2=params["b2"][None, :].astype(f32),       # (1, 128)
        wat=params["wa"].T.astype(bf16),            # (A, 128)
        ba=params["ba"][None, :].astype(f32),       # (1, 128)
        wsa_s=wsa[:, :128].T.astype(bf16),          # (128, 128) - s2 half
        wsa_a=wsa[:, 128:].T.astype(bf16),          # (128, 128) - action half
        bsa=params["bsa"][None, :].astype(f32),     # (1, 128)
        wout_row=params["wout"].astype(f32),        # (1, 128) f32 (VPU reduce)
        scalars=jnp.concatenate(
            [params["bc"], params["bout"]]).astype(f32),   # (2,) -> SMEM
    )


# --------------------------------------------------------------- forward ----
def _round_up(x, m):
    return (x + m - 1) // m * m


@jax.jit
def critic_forward(prep, state, action):
    # Accept (B, D) or (B, 1, D) like the PyTorch module.
    if state.ndim == 3:
        state = state[:, 0, :]
    if action.ndim == 3:
        action = action[:, 0, :]
    B, S = state.shape
    A = action.shape[1]

    # Batch tiling: one full block for small B, 512-row blocks for large B.
    TB = min(512, _round_up(B, 8))
    B_pad = _round_up(B, TB)
    pad = B_pad - B
    state_p = jnp.pad(state.astype(jnp.bfloat16), ((0, pad), (0, 0)))
    action_p = jnp.pad(action.astype(jnp.bfloat16), ((0, pad), (0, 0)))

    batched = lambda d: pl.BlockSpec((TB, d), lambda i: (i, 0))
    resident = lambda shape: pl.BlockSpec(shape, lambda i: (0, 0))

    in_specs = [
        batched(S),                       # state
        batched(A),                       # action
        resident((S, 512)),               # w1^T
        resident((1, 512)),               # b1
        resident((512, 256)),             # conv banded matrix
        resident((256, 128)),             # w2^T
        resident((1, 128)),               # b2
        resident((A, 128)),               # wa^T
        resident((1, 128)),               # ba
        resident((128, 128)),             # wsa[:, :128]^T
        resident((128, 128)),             # wsa[:, 128:]^T
        resident((1, 128)),               # bsa
        resident((1, 128)),               # wout row (f32)
        pl.BlockSpec(memory_space=pltpu.MemorySpace.SMEM),   # [bc, bout]
    ]

    flops = 2 * B_pad * (S * 512 + 512 * 256 + 256 * 128
                         + A * 128 + 2 * 128 * 128 + 128)
    weight_bytes = (2 * (S * 512 + 512 * 256 + 256 * 128 + A * 128
                         + 2 * 128 * 128)
                    + 4 * (512 + 3 * 128 + 128 + 2))
    bytes_accessed = 2 * B_pad * (S + A) + 4 * B_pad + weight_bytes

    out = pl.pallas_call(
        _critic_kernel,
        out_shape=jax.ShapeDtypeStruct((B_pad, 1), jnp.float32),
        grid=(B_pad // TB,),
        in_specs=in_specs,
        out_specs=pl.BlockSpec((TB, 1), lambda i: (i, 0)),
        compiler_params=pltpu.CompilerParams(
            dimension_semantics=("parallel",)),
        cost_estimate=pl.CostEstimate(
            flops=flops, transcendentals=0,
            bytes_accessed=int(bytes_accessed)),
    )(state_p, action_p,
      prep["w1t"], prep["b1"],
      prep["convm"],
      prep["w2t"], prep["b2"],
      prep["wat"], prep["ba"],
      prep["wsa_s"], prep["wsa_a"], prep["bsa"],
      prep["wout_row"],
      prep["scalars"])

    # PyTorch returns (B, 1, 1): (batch, channel=1, out_features=1)
    return out[:B, :, None]


# ------------------------------------------------------------- reference ----
def _critic_reference(params, state, action):
    relu = lambda x: jnp.maximum(x, 0.0)
    s0 = relu(state @ params["w1"].T + params["b1"])
    y = jax.lax.conv_general_dilated(
        s0[:, None, :], params["wc"][None, None, :],
        window_strides=(2,), padding=[(4, 4)],
        dimension_numbers=("NCH", "OIH", "NCH"))[:, 0, :]
    s1 = relu(y + params["bc"])
    s2 = relu(s1 @ params["w2"].T + params["b2"])
    a = relu(action @ params["wa"].T + params["ba"])
    sa2 = relu(jnp.concatenate([s2, a], axis=-1) @ params["wsa"].T
               + params["bsa"])
    val = sa2 @ params["wout"].T + params["bout"]
    return val[:, :, None]


if __name__ == "__main__":
    state_dim, action_dim, B = 16, 8, 2
    key = jax.random.PRNGKey(0)
    kp, ks, ka = jax.random.split(key, 3)

    params = make_critic_params(kp, state_dim, action_dim)
    prep = prepare_critic_inference(params)   # one-time, outside the hot path

    state = jax.random.normal(ks, (B, state_dim), jnp.float32)
    action = jax.random.normal(ka, (B, action_dim), jnp.float32)

    val = critic_forward(prep, state, action)
    jax.block_until_ready(val)
    assert val.shape == (B, 1, 1), val.shape
    assert bool(jnp.all(jnp.isfinite(val)))

    # bf16 matmul operands -> loose tolerance vs f32 reference.
    ref = _critic_reference(params, state, action)
    np.testing.assert_allclose(np.asarray(val), np.asarray(ref),
                               rtol=5e-2, atol=5e-2)
    print("KERNEL_OK")
</pallas_src>

<mosaic_0001>
module attributes {stable_mosaic.version = 11 : i64} {
  func.func @_critic_kernel(%arg0: i32, %arg1: memref<8x16xbf16, #tpu.memory_space<vmem>>, %arg2: memref<8x8xbf16, #tpu.memory_space<vmem>>, %arg3: memref<16x512xbf16, #tpu.memory_space<vmem>>, %arg4: memref<1x512xf32, #tpu.memory_space<vmem>>, %arg5: memref<512x256xbf16, #tpu.memory_space<vmem>>, %arg6: memref<256x128xbf16, #tpu.memory_space<vmem>>, %arg7: memref<1x128xf32, #tpu.memory_space<vmem>>, %arg8: memref<8x128xbf16, #tpu.memory_space<vmem>>, %arg9: memref<1x128xf32, #tpu.memory_space<vmem>>, %arg10: memref<128x128xbf16, #tpu.memory_space<vmem>>, %arg11: memref<128x128xbf16, #tpu.memory_space<vmem>>, %arg12: memref<1x128xf32, #tpu.memory_space<vmem>>, %arg13: memref<1x128xf32, #tpu.memory_space<vmem>>, %arg14: memref<2xf32, #tpu.memory_space<smem>>, %arg15: memref<8x1xf32, #tpu.memory_space<vmem>>) attributes {dimension_semantics = [#tpu.dimension_semantics<parallel>], iteration_bounds = array<i64: 1>, scalar_prefetch = 0 : i64, scratch_operands = 0 : i64, tpu.core_type = #tpu.core_type<tc>, window_params = [{transform_indices = @transform_0, window_bounds = array<i64: 8, 16>}, {transform_indices = @transform_1, window_bounds = array<i64: 8, 8>}, {pipeline_mode = #tpu.pipeline_mode<synchronous>, transform_indices = @transform_2, window_bounds = array<i64: 16, 512>}, {pipeline_mode = #tpu.pipeline_mode<synchronous>, transform_indices = @transform_3, window_bounds = array<i64: 1, 512>}, {pipeline_mode = #tpu.pipeline_mode<synchronous>, transform_indices = @transform_4, window_bounds = array<i64: 512, 256>}, {pipeline_mode = #tpu.pipeline_mode<synchronous>, transform_indices = @transform_5, window_bounds = array<i64: 256, 128>}, {pipeline_mode = #tpu.pipeline_mode<synchronous>, transform_indices = @transform_6, window_bounds = array<i64: 1, 128>}, {pipeline_mode = #tpu.pipeline_mode<synchronous>, transform_indices = @transform_7, window_bounds = array<i64: 8, 128>}, {pipeline_mode = #tpu.pipeline_mode<synchronous>, transform_indices = @transform_8, window_bounds = array<i64: 1, 128>}, {pipeline_mode = #tpu.pipeline_mode<synchronous>, transform_indices = @transform_9, window_bounds = array<i64: 128, 128>}, {pipeline_mode = #tpu.pipeline_mode<synchronous>, transform_indices = @transform_10, window_bounds = array<i64: 128, 128>}, {pipeline_mode = #tpu.pipeline_mode<synchronous>, transform_indices = @transform_11, window_bounds = array<i64: 1, 128>}, {pipeline_mode = #tpu.pipeline_mode<synchronous>, transform_indices = @transform_12, window_bounds = array<i64: 1, 128>}, {transform_indices = @transform_13, window_bounds = array<i64: 2>}, {transform_indices = @transform_14, window_bounds = array<i64: 8, 1>}]} {
    %c0 = arith.constant 0 : index
    %c0_0 = arith.constant 0 : index
    %0 = vector.load %arg1[%c0, %c0_0] : memref<8x16xbf16, #tpu.memory_space<vmem>>, vector<8x16xbf16>
    %c0_1 = arith.constant 0 : index
    %c0_2 = arith.constant 0 : index
    %1 = vector.load %arg3[%c0_1, %c0_2] : memref<16x512xbf16, #tpu.memory_space<vmem>>, vector<16x512xbf16>
    %cst = arith.constant dense<0.000000e+00> : vector<8x512xf32>
    %2 = tpu.matmul %0, %1, %cst {dimension_numbers = #tpu.dot_dimension_numbers<[1], [0], [0], [1], [0, 0, 1, 1], [], []>} : vector<8x16xbf16>, vector<16x512xbf16>, vector<8x512xf32> -> vector<8x512xf32>
    %c0_3 = arith.constant 0 : index
    %c0_4 = arith.constant 0 : index
    %3 = vector.load %arg4[%c0_3, %c0_4] : memref<1x512xf32, #tpu.memory_space<vmem>>, vector<1x512xf32>
    %4 = vector.broadcast %3 : vector<1x512xf32> to vector<8x512xf32>
    %5 = arith.addf %2, %4 : vector<8x512xf32>
    %cst_5 = arith.constant 0.000000e+00 : f32
    %6 = vector.broadcast %cst_5 : f32 to vector<8x512xf32>
    %7 = arith.maximumf %5, %6 : vector<8x512xf32>
    %8 = arith.truncf %7 : vector<8x512xf32> to vector<8x512xbf16>
    %c0_6 = arith.constant 0 : index
    %c0_7 = arith.constant 0 : index
    %9 = vector.load %arg5[%c0_6, %c0_7] : memref<512x256xbf16, #tpu.memory_space<vmem>>, vector<512x256xbf16>
    %cst_8 = arith.constant dense<0.000000e+00> : vector<8x256xf32>
    %10 = tpu.matmul %8, %9, %cst_8 {dimension_numbers = #tpu.dot_dimension_numbers<[1], [0], [0], [1], [0, 0, 1, 1], [], []>} : vector<8x512xbf16>, vector<512x256xbf16>, vector<8x256xf32> -> vector<8x256xf32>
    %c0_9 = arith.constant 0 : index
    %11 = memref.load %arg14[%c0_9] : memref<2xf32, #tpu.memory_space<smem>>
    %12 = vector.broadcast %11 : f32 to vector<8x256xf32>
    %13 = arith.addf %10, %12 : vector<8x256xf32>
    %cst_10 = arith.constant 0.000000e+00 : f32
    %14 = vector.broadcast %cst_10 : f32 to vector<8x256xf32>
    %15 = arith.maximumf %13, %14 : vector<8x256xf32>
    %16 = arith.truncf %15 : vector<8x256xf32> to vector<8x256xbf16>
    %c0_11 = arith.constant 0 : index
    %c0_12 = arith.constant 0 : index
    %17 = vector.load %arg6[%c0_11, %c0_12] : memref<256x128xbf16, #tpu.memory_space<vmem>>, vector<256x128xbf16>
    %cst_13 = arith.constant dense<0.000000e+00> : vector<8x128xf32>
    %18 = tpu.matmul %16, %17, %cst_13 {dimension_numbers = #tpu.dot_dimension_numbers<[1], [0], [0], [1], [0, 0, 1, 1], [], []>} : vector<8x256xbf16>, vector<256x128xbf16>, vector<8x128xf32> -> vector<8x128xf32>
    %c0_14 = arith.constant 0 : index
    %c0_15 = arith.constant 0 : index
    %19 = vector.load %arg7[%c0_14, %c0_15] : memref<1x128xf32, #tpu.memory_space<vmem>>, vector<1x128xf32>
    %20 = vector.broadcast %19 : vector<1x128xf32> to vector<8x128xf32>
    %21 = arith.addf %18, %20 : vector<8x128xf32>
    %cst_16 = arith.constant 0.000000e+00 : f32
    %22 = vector.broadcast %cst_16 : f32 to vector<8x128xf32>
    %23 = arith.maximumf %21, %22 : vector<8x128xf32>
    %c0_17 = arith.constant 0 : index
    %c0_18 = arith.constant 0 : index
    %24 = vector.load %arg2[%c0_17, %c0_18] : memref<8x8xbf16, #tpu.memory_space<vmem>>, vector<8x8xbf16>
    %c0_19 = arith.constant 0 : index
    %c0_20 = arith.constant 0 : index
    %25 = vector.load %arg8[%c0_19, %c0_20] : memref<8x128xbf16, #tpu.memory_space<vmem>>, vector<8x128xbf16>
    %cst_21 = arith.constant dense<0.000000e+00> : vector<8x128xf32>
    %26 = tpu.matmul %24, %25, %cst_21 {dimension_numbers = #tpu.dot_dimension_numbers<[1], [0], [0], [1], [0, 0, 1, 1], [], []>} : vector<8x8xbf16>, vector<8x128xbf16>, vector<8x128xf32> -> vector<8x128xf32>
    %c0_22 = arith.constant 0 : index
    %c0_23 = arith.constant 0 : index
    %27 = vector.load %arg9[%c0_22, %c0_23] : memref<1x128xf32, #tpu.memory_space<vmem>>, vector<1x128xf32>
    %28 = vector.broadcast %27 : vector<1x128xf32> to vector<8x128xf32>
    %29 = arith.addf %26, %28 : vector<8x128xf32>
    %cst_24 = arith.constant 0.000000e+00 : f32
    %30 = vector.broadcast %cst_24 : f32 to vector<8x128xf32>
    %31 = arith.maximumf %29, %30 : vector<8x128xf32>
    %32 = arith.truncf %23 : vector<8x128xf32> to vector<8x128xbf16>
    %c0_25 = arith.constant 0 : index
    %c0_26 = arith.constant 0 : index
    %33 = vector.load %arg10[%c0_25, %c0_26] : memref<128x128xbf16, #tpu.memory_space<vmem>>, vector<128x128xbf16>
    %cst_27 = arith.constant dense<0.000000e+00> : vector<8x128xf32>
    %34 = tpu.matmul %32, %33, %cst_27 {dimension_numbers = #tpu.dot_dimension_numbers<[1], [0], [0], [1], [0, 0, 1, 1], [], []>} : vector<8x128xbf16>, vector<128x128xbf16>, vector<8x128xf32> -> vector<8x128xf32>
    %35 = arith.truncf %31 : vector<8x128xf32> to vector<8x128xbf16>
    %c0_28 = arith.constant 0 : index
    %c0_29 = arith.constant 0 : index
    %36 = vector.load %arg11[%c0_28, %c0_29] : memref<128x128xbf16, #tpu.memory_space<vmem>>, vector<128x128xbf16>
    %cst_30 = arith.constant dense<0.000000e+00> : vector<8x128xf32>
    %37 = tpu.matmul %35, %36, %cst_30 {dimension_numbers = #tpu.dot_dimension_numbers<[1], [0], [0], [1], [0, 0, 1, 1], [], []>} : vector<8x128xbf16>, vector<128x128xbf16>, vector<8x128xf32> -> vector<8x128xf32>
    %38 = arith.addf %34, %37 : vector<8x128xf32>
    %c0_31 = arith.constant 0 : index
    %c0_32 = arith.constant 0 : index
    %39 = vector.load %arg12[%c0_31, %c0_32] : memref<1x128xf32, #tpu.memory_space<vmem>>, vector<1x128xf32>
    %40 = vector.broadcast %39 : vector<1x128xf32> to vector<8x128xf32>
    %41 = arith.addf %38, %40 : vector<8x128xf32>
    %cst_33 = arith.constant 0.000000e+00 : f32
    %42 = vector.broadcast %cst_33 : f32 to vector<8x128xf32>
    %43 = arith.maximumf %41, %42 : vector<8x128xf32>
    %c0_34 = arith.constant 0 : index
    %c0_35 = arith.constant 0 : index
    %44 = vector.load %arg13[%c0_34, %c0_35] : memref<1x128xf32, #tpu.memory_space<vmem>>, vector<1x128xf32>
    %45 = vector.broadcast %44 : vector<1x128xf32> to vector<8x128xf32>
    %46 = arith.mulf %43, %45 : vector<8x128xf32>
    %cst_36 = arith.constant dense<0.000000e+00> : vector<8xf32>
    %47 = vector.multi_reduction <add>, %46, %cst_36 [1] : vector<8x128xf32> to vector<8xf32>
    %48 = vector.shape_cast %47 : vector<8xf32> to vector<8x1xf32>
    %c1 = arith.constant 1 : index
    %49 = memref.load %arg14[%c1] : memref<2xf32, #tpu.memory_space<smem>>
    %50 = vector.broadcast %49 : f32 to vector<8x1xf32>
    %51 = arith.addf %48, %50 : vector<8x1xf32>
    %c0_37 = arith.constant 0 : index
    %c0_38 = arith.constant 0 : index
    %52 = vector.load %arg15[%c0_37, %c0_38] : memref<8x1xf32, #tpu.memory_space<vmem>>, vector<8x1xf32>
    tpu.vector_store %arg15[%c0_37, %c0_38], %51 {strides = array<i32>} : memref<8x1xf32, #tpu.memory_space<vmem>>, vector<8x1xf32>,
    return
  }
  func.func @transform_0(%arg0: i32) -> (i32, i32) {
    %c0_i32 = arith.constant 0 : i32
    %c0_i32_0 = arith.constant 0 : i32
    return %arg0, %c0_i32 : i32, i32
  }
  func.func @transform_1(%arg0: i32) -> (i32, i32) {
    %c0_i32 = arith.constant 0 : i32
    %c0_i32_0 = arith.constant 0 : i32
    return %arg0, %c0_i32 : i32, i32
  }
  func.func @transform_2(%arg0: i32) -> (i32, i32) {
    %c0_i32 = arith.constant 0 : i32
    %c0_i32_0 = arith.constant 0 : i32
    %c0_i32_1 = arith.constant 0 : i32
    return %c0_i32, %c0_i32_0 : i32, i32
  }
  func.func @transform_3(%arg0: i32) -> (i32, i32) {
    %c0_i32 = arith.constant 0 : i32
    %c0_i32_0 = arith.constant 0 : i32
    %c0_i32_1 = arith.constant 0 : i32
    return %c0_i32, %c0_i32_0 : i32, i32
  }
  func.func @transform_4(%arg0: i32) -> (i32, i32) {
    %c0_i32 = arith.constant 0 : i32
    %c0_i32_0 = arith.constant 0 : i32
    %c0_i32_1 = arith.constant 0 : i32
    return %c0_i32, %c0_i32_0 : i32, i32
  }
  func.func @transform_5(%arg0: i32) -> (i32, i32) {
    %c0_i32 = arith.constant 0 : i32
    %c0_i32_0 = arith.constant 0 : i32
    %c0_i32_1 = arith.constant 0 : i32
    return %c0_i32, %c0_i32_0 : i32, i32
  }
  func.func @transform_6(%arg0: i32) -> (i32, i32) {
    %c0_i32 = arith.constant 0 : i32
    %c0_i32_0 = arith.constant 0 : i32
    %c0_i32_1 = arith.constant 0 : i32
    return %c0_i32, %c0_i32_0 : i32, i32
  }
  func.func @transform_7(%arg0: i32) -> (i32, i32) {
    %c0_i32 = arith.constant 0 : i32
    %c0_i32_0 = arith.constant 0 : i32
    %c0_i32_1 = arith.constant 0 : i32
    return %c0_i32, %c0_i32_0 : i32, i32
  }
  func.func @transform_8(%arg0: i32) -> (i32, i32) {
    %c0_i32 = arith.constant 0 : i32
    %c0_i32_0 = arith.constant 0 : i32
    %c0_i32_1 = arith.constant 0 : i32
    return %c0_i32, %c0_i32_0 : i32, i32
  }
  func.func @transform_9(%arg0: i32) -> (i32, i32) {
    %c0_i32 = arith.constant 0 : i32
    %c0_i32_0 = arith.constant 0 : i32
    %c0_i32_1 = arith.constant 0 : i32
    return %c0_i32, %c0_i32_0 : i32, i32
  }
  func.func @transform_10(%arg0: i32) -> (i32, i32) {
    %c0_i32 = arith.constant 0 : i32
    %c0_i32_0 = arith.constant 0 : i32
    %c0_i32_1 = arith.constant 0 : i32
    return %c0_i32, %c0_i32_0 : i32, i32
  }
  func.func @transform_11(%arg0: i32) -> (i32, i32) {
    %c0_i32 = arith.constant 0 : i32
    %c0_i32_0 = arith.constant 0 : i32
    %c0_i32_1 = arith.constant 0 : i32
    return %c0_i32, %c0_i32_0 : i32, i32
  }
  func.func @transform_12(%arg0: i32) -> (i32, i32) {
    %c0_i32 = arith.constant 0 : i32
    %c0_i32_0 = arith.constant 0 : i32
    %c0_i32_1 = arith.constant 0 : i32
    return %c0_i32, %c0_i32_0 : i32, i32
  }
  func.func @transform_13(%arg0: i32) -> i32 {
    %c0_i32 = arith.constant 0 : i32
    %c0_i32_0 = arith.constant 0 : i32
    return %c0_i32 : i32
  }
  func.func @transform_14(%arg0: i32) -> (i32, i32) {
    %c0_i32 = arith.constant 0 : i32
    %c0_i32_0 = arith.constant 0 : i32
    return %arg0, %c0_i32 : i32, i32
  }
}

</mosaic_0001>

<llo_original>
// kernel: critic_forward.1
$region0: #{critic_forward.1}
  #allocation0 [shape = 'u32[]', space=smem, size = 0x4, offset = 0x4, fixed_abs, tag = 'smem constant byte address 0x4 - core index']
  #allocation1 [shape = 'u32[144,128]{1,0:T(1,128)}', space=vmem, size = 0x12000, scoped, tag = 'internal scratch']
  %s0 = inlined_call_operand.vmem [shape: bf16[8,16], index: 0, kind: input, shape index: {}]
  %s1 = inlined_call_operand.vmem [shape: bf16[8,8], index: 1, kind: input, shape index: {}]
  %s2 = inlined_call_operand.vmem [shape: bf16[16,512], index: 2, kind: input, shape index: {}]
  %s3 = inlined_call_operand.vmem [shape: f32[1,512], index: 3, kind: input, shape index: {}]
  %s4 = inlined_call_operand.hbm [shape: bf16[512,256], index: 4, kind: input, shape index: {}]
  %s5 = inlined_call_operand.hbm [shape: bf16[256,128], index: 5, kind: input, shape index: {}]
  %s6 = inlined_call_operand.vmem [shape: f32[1,128], index: 6, kind: input, shape index: {}]
  %s7 = inlined_call_operand.vmem [shape: bf16[8,128], index: 7, kind: input, shape index: {}]
  %s8 = inlined_call_operand.vmem [shape: f32[1,128], index: 8, kind: input, shape index: {}]
  %s9 = inlined_call_operand.hbm [shape: bf16[128,128], index: 9, kind: input, shape index: {}]
  %s10 = inlined_call_operand.hbm [shape: bf16[128,128], index: 10, kind: input, shape index: {}]
  %s11 = inlined_call_operand.hbm [shape: f32[1,128], index: 11, kind: input, shape index: {}]
  %s12 = inlined_call_operand.vmem [shape: f32[1,128], index: 12, kind: input, shape index: {}]
  %s13 = inlined_call_operand.hbm [shape: f32[2], index: 13, kind: input, shape index: {}]
  %s14 = inlined_call_operand.vmem [shape: f32[8,1], index: 14, kind: output, shape index: {}]
  %s15 = sld [smem:[#allocation0]]
  $region90: #{critic_forward.1} parent=0
    _
  %s17 = ssub.s32 1, %s15
  %s18 = scalar_select 0, %s17, %s15
  $region1: #{critic_forward.1} parent=0
    #allocation2 [shape = 'u8[262144]{0}', space=vmem, size = 0x40000, scoped, tag = 'input window, operand 4, single buffered']
    #allocation3 [shape = 's32[1]{0}', space=sflag, size = 0x4, scoped, tag = 'scoped memory for critic_forward.1']
    #allocation4 [shape = 's32[1]{0}', space=sflag, size = 0x4, scoped, tag = 'scoped memory for critic_forward.1']
    #allocation5 [shape = 'u8[65536]{0}', space=vmem, size = 0x10000, scoped, tag = 'input window, operand 5, single buffered']
    #allocation6 [shape = 's32[1]{0}', space=sflag, size = 0x4, scoped, tag = 'scoped memory for critic_forward.1']
    #allocation7 [shape = 'u8[32768]{0}', space=vmem, size = 0x8000, scoped, tag = 'input window, operand 9, single buffered']
    #allocation8 [shape = 'u8[32768]{0}', space=vmem, size = 0x8000, scoped, tag = 'input window, operand 10, single buffered']
    #allocation9 [shape = 's32[1]{0}', space=sflag, size = 0x4, scoped, tag = 'scoped memory for critic_forward.1']
    #allocation10 [shape = 'u8[512]{0}', space=vmem, size = 0x400, scoped, tag = 'input window, operand 11, single buffered']
    #allocation11 [shape = 'u8[512]{0}', space=smem, size = 0x200, scoped, tag = 'input window, operand 13, single buffered']
    %19 = vsyncpa [#allocation3], 0
    %20 = vsyncpa [#allocation6], 0
    %21 = vsyncpa [#allocation9], 0
    %22 = vsyncpa [#allocation4], 0
    // Predicated region
    $region2: #{critic_forward.1} parent=1 // pred_check
      _
    $region3: #{critic_forward.1} parent=1 // pred_check_branch
      %24 = sbr.rel (0) target = $region5
    $region4: #{critic_forward.1} parent=1 // pred_region
      _
    $region5: #{critic_forward.1} parent=1 // pred_fallthru
      _
    // Predicated region
    $region6: #{critic_forward.1} parent=1 // pred_check
      _
    $region7: #{critic_forward.1} parent=1 // pred_check_branch
      %26 = sbr.rel (0) target = $region9
    $region8: #{critic_forward.1} parent=1 // pred_region
      _
    $region9: #{critic_forward.1} parent=1 // pred_fallthru
      _
    // Predicated region
    $region10: #{critic_forward.1} parent=1 // pred_check
      _
    $region11: #{critic_forward.1} parent=1 // pred_check_branch
      %28 = sbr.rel (0) target = $region13
    $region12: #{critic_forward.1} parent=1 // pred_region
      _
    $region13: #{critic_forward.1} parent=1 // pred_fallthru
      _
    // Predicated region
    $region14: #{critic_forward.1} parent=1 // pred_check
      _
    $region15: #{critic_forward.1} parent=1 // pred_check_branch
      %30 = sbr.rel (0) target = $region17
    $region16: #{critic_forward.1} parent=1 // pred_region
      _
    $region17: #{critic_forward.1} parent=1 // pred_fallthru
      _
    // Predicated region
    $region18: #{critic_forward.1} parent=1 // pred_check
      _
    $region19: #{critic_forward.1} parent=1 // pred_check_branch
      %32 = sbr.rel (0) target = $region21
    $region20: #{critic_forward.1} parent=1 // pred_region
      %s34 = ssub.s32 8192, 8192
      %35 = vsyncadd [#allocation3], %s34
      %s36 = sshll.u32 [#allocation2], 4
      %s37 = int_to_ptr.vmem [resolvable:$true] %s36
      %42 = dma.hbm_to_vmem [thread:$0]  %s4, 8192, %s37, [#allocation3], 128, 128, 8
    $region21: #{critic_forward.1} parent=1 // pred_fallthru
      _
    // Predicated region
    $region22: #{critic_forward.1} parent=1 // pred_check
      _
    $region23: #{critic_forward.1} parent=1 // pred_check_branch
      %44 = sbr.rel (0) target = $region25
    $region24: #{critic_forward.1} parent=1 // pred_region
      %s46 = ssub.s32 2048, 2048
      %47 = vsyncadd [#allocation6], %s46
      %s48 = sshll.u32 [#allocation5], 4
      %s49 = int_to_ptr.vmem [resolvable:$true] %s48
      %54 = dma.hbm_to_vmem [thread:$0]  %s5, 2048, %s49, [#allocation6], 64, 64, 4
    $region25: #{critic_forward.1} parent=1 // pred_fallthru
      _
    // Predicated region
    $region26: #{critic_forward.1} parent=1 // pred_check
      _
    $region27: #{critic_forward.1} parent=1 // pred_check_branch
      %56 = sbr.rel (0) target = $region29
    $region28: #{critic_forward.1} parent=1 // pred_region
      _
    $region29: #{critic_forward.1} parent=1 // pred_fallthru
      _
    // Predicated region
    $region30: #{critic_forward.1} parent=1 // pred_check
      _
    $region31: #{critic_forward.1} parent=1 // pred_check_branch
      %58 = sbr.rel (0) target = $region33
    $region32: #{critic_forward.1} parent=1 // pred_region
      _
    $region33: #{critic_forward.1} parent=1 // pred_fallthru
      _
    // Predicated region
    $region34: #{critic_forward.1} parent=1 // pred_check
      _
    $region35: #{critic_forward.1} parent=1 // pred_check_branch
      %60 = sbr.rel (0) target = $region37
    $region36: #{critic_forward.1} parent=1 // pred_region
      _
    $region37: #{critic_forward.1} parent=1 // pred_fallthru
      _
    // Predicated region
    $region38: #{critic_forward.1} parent=1 // pred_check
      _
    $region39: #{critic_forward.1} parent=1 // pred_check_branch
      %62 = sbr.rel (0) target = $region41
    $region40: #{critic_forward.1} parent=1 // pred_region
      %s64 = ssub.s32 1024, 1024
      %65 = vsyncadd [#allocation6], %s64
      %s66 = sshll.u32 [#allocation7], 4
      %s67 = int_to_ptr.vmem [resolvable:$true] %s66
      %72 = dma.hbm_to_vmem [thread:$0]  %s9, 1024, %s67, [#allocation6], 64, 64, 4
    $region41: #{critic_forward.1} parent=1 // pred_fallthru
      _
    // Predicated region
    $region42: #{critic_forward.1} parent=1 // pred_check
      _
    $region43: #{critic_forward.1} parent=1 // pred_check_branch
      %74 = sbr.rel (0) target = $region45
    $region44: #{critic_forward.1} parent=1 // pred_region
      %s76 = ssub.s32 1024, 1024
      %77 = vsyncadd [#allocation9], %s76
      %s78 = sshll.u32 [#allocation8], 4
      %s79 = int_to_ptr.vmem [resolvable:$true] %s78
      %84 = dma.hbm_to_vmem [thread:$0]  %s10, 1024, %s79, [#allocation9], 64, 64, 4
    $region45: #{critic_forward.1} parent=1 // pred_fallthru
      _
    // Predicated region
    $region46: #{critic_forward.1} parent=1 // pred_check
      _
    $region47: #{critic_forward.1} parent=1 // pred_check_branch
      %86 = sbr.rel (0) target = $region49
    $region48: #{critic_forward.1} parent=1 // pred_region
      %s88 = ssub.s32 16, 16
      %89 = vsyncadd [#allocation9], %s88
      %s91 = sshll.u32 [#allocation10], 4
      %s92 = int_to_ptr.vmem [resolvable:$true] %s91
      %94 = dma.hbm_to_vmem [thread:$0]  %s11, 16, %s92, [#allocation9]
    $region49: #{critic_forward.1} parent=1 // pred_fallthru
      _
    // Predicated region
    $region50: #{critic_forward.1} parent=1 // pred_check
      _
    $region51: #{critic_forward.1} parent=1 // pred_check_branch
      %96 = sbr.rel (0) target = $region53
    $region52: #{critic_forward.1} parent=1 // pred_region
      _
    $region53: #{critic_forward.1} parent=1 // pred_fallthru
      _
    // Predicated region
    $region54: #{critic_forward.1} parent=1 // pred_check
      _
    $region55: #{critic_forward.1} parent=1 // pred_check_branch
      %98 = sbr.rel (0) target = $region57
    $region56: #{critic_forward.1} parent=1 // pred_region
      %s100 = ssub.s32 16, 16
      %101 = vsyncadd [#allocation4], %s100
      %104 = dma.hbm_to_smem %s13, 16, [#allocation11], [#allocation4]
    $region57: #{critic_forward.1} parent=1 // pred_fallthru
      _
    // Predicated region
    $region58: #{critic_forward.1} parent=1 // pred_check
      _
    $region59: #{critic_forward.1} parent=1 // pred_check_branch
      %106 = sbr.rel (0) target = $region61
    $region60: #{critic_forward.1} parent=1 // pred_region
      %107 = dma.done [#allocation3], 8192
    $region61: #{critic_forward.1} parent=1 // pred_fallthru
      _
    // Predicated region
    $region62: #{critic_forward.1} parent=1 // pred_check
      _
    $region63: #{critic_forward.1} parent=1 // pred_check_branch
      %109 = sbr.rel (0) target = $region65
    $region64: #{critic_forward.1} parent=1 // pred_region
      %110 = dma.done [#allocation6], 2048
    $region65: #{critic_forward.1} parent=1 // pred_fallthru
      _
    // Predicated region
    $region66: #{critic_forward.1} parent=1 // pred_check
      _
    $region67: #{critic_forward.1} parent=1 // pred_check_branch
      %112 = sbr.rel (0) target = $region69
    $region68: #{critic_forward.1} parent=1 // pred_region
      %113 = dma.done [#allocation6], 1024
    $region69: #{critic_forward.1} parent=1 // pred_fallthru
      _
    // Predicated region
    $region70: #{critic_forward.1} parent=1 // pred_check
      _
    $region71: #{critic_forward.1} parent=1 // pred_check_branch
      %115 = sbr.rel (0) target = $region73
    $region72: #{critic_forward.1} parent=1 // pred_region
      %116 = dma.done [#allocation9], 1024
    $region73: #{critic_forward.1} parent=1 // pred_fallthru
      _
    // Predicated region
    $region74: #{critic_forward.1} parent=1 // pred_check
      _
    $region75: #{critic_forward.1} parent=1 // pred_check_branch
      %118 = sbr.rel (0) target = $region77
    $region76: #{critic_forward.1} parent=1 // pred_region
      %119 = dma.done [#allocation9], 16
    $region77: #{critic_forward.1} parent=1 // pred_fallthru
      _
    // Predicated region
    $region78: #{critic_forward.1} parent=1 // pred_check
      _
    $region79: #{critic_forward.1} parent=1 // pred_check_branch
      %121 = sbr.rel (0) target = $region81
    $region80: #{critic_forward.1} parent=1 // pred_region
      %122 = dma.done [#allocation4], 16
    $region81: #{critic_forward.1} parent=1 // pred_fallthru
      _
    %123 = sfence
    %v125 = vld [vmem:[%s0] sm:$0xf]
    %v126 = vld [vmem:[%s2] sm:$0xff]
    %v127 = vld [vmem:[%s2 + $0x8] sm:$0xff]
    %v128 = vld [vmem:[%s2 + $0x10] sm:$0xff]
    %v129 = vld [vmem:[%s2 + $0x18] sm:$0xff]
    %v130 = vld [vmem:[%s3] sm:$0xf]
    %v132 = vlaneseq
    %v133 = vshrl.u32 %v132, 7
    %v134 = vsub.s32 0, %v133
    %v135 = vrot.slane %v130, %v134
    %v136 = vlaneseq
    %v137 = vshrl.u32 %v136, 7
    %v138 = vsub.s32 1, %v137
    %v139 = vrot.slane %v130, %v138
    %v140 = vlaneseq
    %v141 = vshrl.u32 %v140, 7
    %v142 = vsub.s32 2, %v141
    %v143 = vrot.slane %v130, %v142
    %v144 = vlaneseq
    %v145 = vshrl.u32 %v144, 7
    %v146 = vsub.s32 3, %v145
    %v147 = vrot.slane %v130, %v146
    %v156 = vunpack.c.l.b16 %v126
    %v157 = vunpack.c.h.b16 %v126
    %v158 = vunpack.c.l.b16 %v127
    %v159 = vunpack.c.h.b16 %v127
    %v160 = vunpack.c.l.b16 %v128
    %v161 = vunpack.c.h.b16 %v128
    %v162 = vunpack.c.l.b16 %v129
    %v163 = vunpack.c.h.b16 %v129
    %v164 = vpack.c.b16 %v160, %v156
    %v165 = vpack.c.b16 %v161, %v157
    %v166 = vpack.c.b16 %v162, %v158
    %v167 = vpack.c.b16 %v163, %v159
    %vm172 = vcmask 130048
    %v174 = vsel %vm172, %v125, 0
    %176 = vmatprep.subr.bf16.mxu0 %v165
    %177 = vmatpush1.bf16.msra.mxu0 %v164
    %178 = vmatprep.subr.bf16.mxu0 0
    %179 = vmatpush1.bf16.msra.mxu0 0
    %180 = vmatprep.subr.bf16.mxu0 0
    %181 = vmatpush1.bf16.msra.mxu0 0
    %182 = vmatprep.subr.bf16.mxu0 0
    %183 = vmatpush1.bf16.msra.mxu0 0
    %184 = vmatprep.subr.bf16.mxu0 0
    %185 = vmatpush1.bf16.msra.mxu0 0
    %186 = vmatprep.subr.bf16.mxu0 0
    %187 = vmatpush1.bf16.msra.mxu0 0
    %188 = vmatprep.subr.bf16.mxu0 0
    %189 = vmatpush1.bf16.msra.mxu0 0
    %190 = vmatprep.subr.bf16.mxu0 0
    %191 = vmatpush1.bf16.msra.mxu0 0
    %192 = vmatprep.subr.bf16.mxu0 0
    %193 = vmatpush1.bf16.msra.mxu0 0
    %194 = vmatprep.subr.bf16.mxu0 0
    %195 = vmatpush1.bf16.msra.mxu0 0
    %196 = vmatprep.subr.bf16.mxu0 0
    %197 = vmatpush1.bf16.msra.mxu0 0
    %198 = vmatprep.subr.bf16.mxu0 0
    %199 = vmatpush1.bf16.msra.mxu0 0
    %200 = vmatprep.subr.bf16.mxu0 0
    %201 = vmatpush1.bf16.msra.mxu0 0
    %202 = vmatprep.subr.bf16.mxu0 0
    %203 = vmatpush1.bf16.msra.mxu0 0
    %204 = vmatprep.subr.bf16.mxu0 0
    %205 = vmatpush1.bf16.msra.mxu0 0
    %206 = vmatprep.subr.bf16.mxu0 0
    %207 = vmatpush1.bf16.msra.mxu0 0
    %208 = vmatprep.mubr.bf16.mxu0 0
    %209 = vmatmul.mubr.bf16.gmra.mrb[0].mxu0 %v174
    %v210 = vpop.f32.mrb[0].mxu0
    %v211 = vadd.f32 %v135, %v210
    %v212 = vpop.f32.mrb[0].mxu0
    %v213 = vadd.f32 %v139, %v212
    %v214 = vpop.f32.mrb[0].mxu0
    %v215 = vpop.f32.mrb[0].mxu0
    %216 = vdwg.mxu0
    %217 = vmatprep.subr.bf16.mxu0 %v167
    %218 = vmatpush1.bf16.msra.mxu0 %v166
    %219 = vmatprep.subr.bf16.mxu0 0
    %220 = vmatpush1.bf16.msra.mxu0 0
    %221 = vmatprep.subr.bf16.mxu0 0
    %222 = vmatpush1.bf16.msra.mxu0 0
    %223 = vmatprep.subr.bf16.mxu0 0
    %224 = vmatpush1.bf16.msra.mxu0 0
    %225 = vmatprep.subr.bf16.mxu0 0
    %226 = vmatpush1.bf16.msra.mxu0 0
    %227 = vmatprep.subr.bf16.mxu0 0
    %228 = vmatpush1.bf16.msra.mxu0 0
    %229 = vmatprep.subr.bf16.mxu0 0
    %230 = vmatpush1.bf16.msra.mxu0 0
    %231 = vmatprep.subr.bf16.mxu0 0
    %232 = vmatpush1.bf16.msra.mxu0 0
    %233 = vmatprep.subr.bf16.mxu0 0
    %234 = vmatpush1.bf16.msra.mxu0 0
    %235 = vmatprep.subr.bf16.mxu0 0
    %236 = vmatpush1.bf16.msra.mxu0 0
    %237 = vmatprep.subr.bf16.mxu0 0
    %238 = vmatpush1.bf16.msra.mxu0 0
    %239 = vmatprep.subr.bf16.mxu0 0
    %240 = vmatpush1.bf16.msra.mxu0 0
    %241 = vmatprep.subr.bf16.mxu0 0
    %242 = vmatpush1.bf16.msra.mxu0 0
    %243 = vmatprep.subr.bf16.mxu0 0
    %244 = vmatpush1.bf16.msra.mxu0 0
    %245 = vmatprep.subr.bf16.mxu0 0
    %246 = vmatpush1.bf16.msra.mxu0 0
    %247 = vmatprep.subr.bf16.mxu0 0
    %248 = vmatpush1.bf16.msra.mxu0 0
    %249 = vmatprep.mubr.bf16.mxu0 0
    %250 = vmatmul.mubr.bf16.gmra.mrb[0].mxu0 %v174
    %v251 = vpop.f32.mrb[0].mxu0
    %v252 = vadd.f32 %v143, %v251
    %v253 = vpop.f32.mrb[0].mxu0
    %v254 = vadd.f32 %v147, %v253
    %v255 = vpop.f32.mrb[0].mxu0
    %v256 = vpop.f32.mrb[0].mxu0
    %257 = vdwg.mxu0
    %v258 = vmax.f32 %v211, 0.0
    %v259 = vmax.f32 %v213, 0.0
    %v260 = vmax.f32 %v252, 0.0
    %v261 = vmax.f32 %v254, 0.0
    %v262 = vpack.c.bf16 %v258, %v258
    %v263 = vpack.c.bf16 %v259, %v259
    %v264 = vpack.c.bf16 %v260, %v260
    %v265 = vpack.c.bf16 %v261, %v261
    %v266 = vld [vmem:[#allocation2] sm:$0xff]
    %v267 = vld [vmem:[#allocation2 + $0x8] sm:$0xff]
    %v268 = vld [vmem:[#allocation2 + $0x10] sm:$0xff]
    %v269 = vld [vmem:[#allocation2 + $0x18] sm:$0xff]
    %v270 = vld [vmem:[#allocation2 + $0x20] sm:$0xff]
    %v271 = vld [vmem:[#allocation2 + $0x28] sm:$0xff]
    %v272 = vld [vmem:[#allocation2 + $0x30] sm:$0xff]
    %v273 = vld [vmem:[#allocation2 + $0x38] sm:$0xff]
    %v274 = vld [vmem:[#allocation2 + $0x40] sm:$0xff]
    %v275 = vld [vmem:[#allocation2 + $0x48] sm:$0xff]
    %v276 = vld [vmem:[#allocation2 + $0x50] sm:$0xff]
    %v277 = vld [vmem:[#allocation2 + $0x58] sm:$0xff]
    %v278 = vld [vmem:[#allocation2 + $0x60] sm:$0xff]
    %v279 = vld [vmem:[#allocation2 + $0x68] sm:$0xff]
    %v280 = vld [vmem:[#allocation2 + $0x70] sm:$0xff]
    %v281 = vld [vmem:[#allocation2 + $0x78] sm:$0xff]
    %v282 = vld [vmem:[#allocation2 + $0x80] sm:$0xff]
    %v283 = vld [vmem:[#allocation2 + $0x88] sm:$0xff]
    %v284 = vld [vmem:[#allocation2 + $0x90] sm:$0xff]
    %v285 = vld [vmem:[#allocation2 + $0x98] sm:$0xff]
    %v286 = vld [vmem:[#allocation2 + $0xa0] sm:$0xff]
    %v287 = vld [vmem:[#allocation2 + $0xa8] sm:$0xff]
    %v288 = vld [vmem:[#allocation2 + $0xb0] sm:$0xff]
    %v289 = vld [vmem:[#allocation2 + $0xb8] sm:$0xff]
    %v290 = vld [vmem:[#allocation2 + $0xc0] sm:$0xff]
    %v291 = vld [vmem:[#allocation2 + $0xc8] sm:$0xff]
    %v292 = vld [vmem:[#allocation2 + $0xd0] sm:$0xff]
    %v293 = vld [vmem:[#allocation2 + $0xd8] sm:$0xff]
    %v294 = vld [vmem:[#allocation2 + $0xe0] sm:$0xff]
    %v295 = vld [vmem:[#allocation2 + $0xe8] sm:$0xff]
    %v296 = vld [vmem:[#allocation2 + $0xf0] sm:$0xff]
    %v297 = vld [vmem:[#allocation2 + $0xf8] sm:$0xff]
    %v298 = vld [vmem:[#allocation2 + $0x100] sm:$0xff]
    %v299 = vld [vmem:[#allocation2 + $0x108] sm:$0xff]
    %v300 = vld [vmem:[#allocation2 + $0x110] sm:$0xff]
    %v301 = vld [vmem:[#allocation2 + $0x118] sm:$0xff]
    %v302 = vld [vmem:[#allocation2 + $0x120] sm:$0xff]
    %v303 = vld [vmem:[#allocation2 + $0x128] sm:$0xff]
    %v304 = vld [vmem:[#allocation2 + $0x130] sm:$0xff]
    %v305 = vld [vmem:[#allocation2 + $0x138] sm:$0xff]
    %v306 = vld [vmem:[#allocation2 + $0x140] sm:$0xff]
    %v307 = vld [vmem:[#allocation2 + $0x148] sm:$0xff]
    %v308 = vld [vmem:[#allocation2 + $0x150] sm:$0xff]
    %v309 = vld [vmem:[#allocation2 + $0x158] sm:$0xff]
    %v310 = vld [vmem:[#allocation2 + $0x160] sm:$0xff]
    %v311 = vld [vmem:[#allocation2 + $0x168] sm:$0xff]
    %v312 = vld [vmem:[#allocation2 + $0x170] sm:$0xff]
    %v313 = vld [vmem:[#allocation2 + $0x178] sm:$0xff]
    %v314 = vld [vmem:[#allocation2 + $0x180] sm:$0xff]
    %v315 = vld [vmem:[#allocation2 + $0x188] sm:$0xff]
    %v316 = vld [vmem:[#allocation2 + $0x190] sm:$0xff]
    %v317 = vld [vmem:[#allocation2 + $0x198] sm:$0xff]
    %v318 = vld [vmem:[#allocation2 + $0x1a0] sm:$0xff]
    %v319 = vld [vmem:[#allocation2 + $0x1a8] sm:$0xff]
    %v320 = vld [vmem:[#allocation2 + $0x1b0] sm:$0xff]
    %v321 = vld [vmem:[#allocation2 + $0x1b8] sm:$0xff]
    %v322 = vld [vmem:[#allocation2 + $0x1c0] sm:$0xff]
    %v323 = vld [vmem:[#allocation2 + $0x1c8] sm:$0xff]
    %v324 = vld [vmem:[#allocation2 + $0x1d0] sm:$0xff]
    %v325 = vld [vmem:[#allocation2 + $0x1d8] sm:$0xff]
    %v326 = vld [vmem:[#allocation2 + $0x1e0] sm:$0xff]
    %v327 = vld [vmem:[#allocation2 + $0x1e8] sm:$0xff]
    %v328 = vld [vmem:[#allocation2 + $0x1f0] sm:$0xff]
    %v329 = vld [vmem:[#allocation2 + $0x1f8] sm:$0xff]
    %s330 = sld [smem:[#allocation11]]
    %v331 = vstv %s330
    %v396 = vunpack.c.l.b16 %v266
    %v397 = vunpack.c.h.b16 %v266
    %v398 = vunpack.c.l.b16 %v267
    %v399 = vunpack.c.h.b16 %v267
    %v400 = vunpack.c.l.b16 %v268
    %v401 = vunpack.c.h.b16 %v268
    %v402 = vunpack.c.l.b16 %v269
    %v403 = vunpack.c.h.b16 %v269
    %v404 = vunpack.c.l.b16 %v270
    %v405 = vunpack.c.h.b16 %v270
    %v406 = vunpack.c.l.b16 %v271
    %v407 = vunpack.c.h.b16 %v271
    %v408 = vunpack.c.l.b16 %v272
    %v409 = vunpack.c.h.b16 %v272
    %v410 = vunpack.c.l.b16 %v273
    %v411 = vunpack.c.h.b16 %v273
    %v412 = vunpack.c.l.b16 %v274
    %v413 = vunpack.c.h.b16 %v274
    %v414 = vunpack.c.l.b16 %v275
    %v415 = vunpack.c.h.b16 %v275
    %v416 = vunpack.c.l.b16 %v276
    %v417 = vunpack.c.h.b16 %v276
    %v418 = vunpack.c.l.b16 %v277
    %v419 = vunpack.c.h.b16 %v277
    %v420 = vunpack.c.l.b16 %v278
    %v421 = vunpack.c.h.b16 %v278
    %v422 = vunpack.c.l.b16 %v279
    %v423 = vunpack.c.h.b16 %v279
    %v424 = vunpack.c.l.b16 %v280
    %v425 = vunpack.c.h.b16 %v280
    %v426 = vunpack.c.l.b16 %v281
    %v427 = vunpack.c.h.b16 %v281
    %v428 = vunpack.c.l.b16 %v282
    %v429 = vunpack.c.h.b16 %v282
    %v430 = vunpack.c.l.b16 %v283
    %v431 = vunpack.c.h.b16 %v283
    %v432 = vunpack.c.l.b16 %v284
    %v433 = vunpack.c.h.b16 %v284
    %v434 = vunpack.c.l.b16 %v285
    %v435 = vunpack.c.h.b16 %v285
    %v436 = vunpack.c.l.b16 %v286
    %v437 = vunpack.c.h.b16 %v286
    %v438 = vunpack.c.l.b16 %v287
    %v439 = vunpack.c.h.b16 %v287
    %v440 = vunpack.c.l.b16 %v288
    %v441 = vunpack.c.h.b16 %v288
    %v442 = vunpack.c.l.b16 %v289
    %v443 = vunpack.c.h.b16 %v289
    %v444 = vunpack.c.l.b16 %v290
    %v445 = vunpack.c.h.b16 %v290
    %v446 = vunpack.c.l.b16 %v291
    %v447 = vunpack.c.h.b16 %v291
    %v448 = vunpack.c.l.b16 %v292
    %v449 = vunpack.c.h.b16 %v292
    %v450 = vunpack.c.l.b16 %v293
    %v451 = vunpack.c.h.b16 %v293
    %v452 = vunpack.c.l.b16 %v294
    %v453 = vunpack.c.h.b16 %v294
    %v454 = vunpack.c.l.b16 %v295
    %v455 = vunpack.c.h.b16 %v295
    %v456 = vunpack.c.l.b16 %v296
    %v457 = vunpack.c.h.b16 %v296
    %v458 = vunpack.c.l.b16 %v297
    %v459 = vunpack.c.h.b16 %v297
    %v460 = vunpack.c.l.b16 %v298
    %v461 = vunpack.c.h.b16 %v298
    %v462 = vunpack.c.l.b16 %v299
    %v463 = vunpack.c.h.b16 %v299
    %v464 = vunpack.c.l.b16 %v300
    %v465 = vunpack.c.h.b16 %v300
    %v466 = vunpack.c.l.b16 %v301
    %v467 = vunpack.c.h.b16 %v301
    %v468 = vunpack.c.l.b16 %v302
    %v469 = vunpack.c.h.b16 %v302
    %v470 = vunpack.c.l.b16 %v303
    %v471 = vunpack.c.h.b16 %v303
    %v472 = vunpack.c.l.b16 %v304
    %v473 = vunpack.c.h.b16 %v304
    %v474 = vunpack.c.l.b16 %v305
    %v475 = vunpack.c.h.b16 %v305
    %v476 = vunpack.c.l.b16 %v306
    %v477 = vunpack.c.h.b16 %v306
    %v478 = vunpack.c.l.b16 %v307
    %v479 = vunpack.c.h.b16 %v307
    %v480 = vunpack.c.l.b16 %v308
    %v481 = vunpack.c.h.b16 %v308
    %v482 = vunpack.c.l.b16 %v309
    %v483 = vunpack.c.h.b16 %v309
    %v484 = vunpack.c.l.b16 %v310
    %v485 = vunpack.c.h.b16 %v310
    %v486 = vunpack.c.l.b16 %v311
    %v487 = vunpack.c.h.b16 %v311
    %v488 = vunpack.c.l.b16 %v312
    %v489 = vunpack.c.h.b16 %v312
    %v490 = vunpack.c.l.b16 %v313
    %v491 = vunpack.c.h.b16 %v313
    %v492 = vunpack.c.l.b16 %v314
    %v493 = vunpack.c.h.b16 %v314
    %v494 = vunpack.c.l.b16 %v315
    %v495 = vunpack.c.h.b16 %v315
    %v496 = vunpack.c.l.b16 %v316
    %v497 = vunpack.c.h.b16 %v316
    %v498 = vunpack.c.l.b16 %v317
    %v499 = vunpack.c.h.b16 %v317
    %v500 = vunpack.c.l.b16 %v318
    %v501 = vunpack.c.h.b16 %v318
    %v502 = vunpack.c.l.b16 %v319
    %v503 = vunpack.c.h.b16 %v319
    %v504 = vunpack.c.l.b16 %v320
    %v505 = vunpack.c.h.b16 %v320
    %v506 = vunpack.c.l.b16 %v321
    %v507 = vunpack.c.h.b16 %v321
    %v508 = vunpack.c.l.b16 %v322
    %v509 = vunpack.c.h.b16 %v322
    %v510 = vunpack.c.l.b16 %v323
    %v511 = vunpack.c.h.b16 %v323
    %v512 = vunpack.c.l.b16 %v324
    %v513 = vunpack.c.h.b16 %v324
    %v514 = vunpack.c.l.b16 %v325
    %v515 = vunpack.c.h.b16 %v325
    %v516 = vunpack.c.l.b16 %v326
    %v517 = vunpack.c.h.b16 %v326
    %v518 = vunpack.c.l.b16 %v327
    %v519 = vunpack.c.h.b16 %v327
    %v520 = vunpack.c.l.b16 %v328
    %v521 = vunpack.c.h.b16 %v328
    %v522 = vunpack.c.l.b16 %v329
    %v523 = vunpack.c.h.b16 %v329
    %v524 = vpack.c.b16 %v398, %v396
    %v525 = vpack.c.b16 %v399, %v397
    %v526 = vpack.c.b16 %v402, %v400
    %v527 = vpack.c.b16 %v403, %v401
    %v528 = vpack.c.b16 %v406, %v404
    %v529 = vpack.c.b16 %v407, %v405
    %v530 = vpack.c.b16 %v410, %v408
    %v531 = vpack.c.b16 %v411, %v409
    %v532 = vpack.c.b16 %v414, %v412
    %v533 = vpack.c.b16 %v415, %v413
    %v534 = vpack.c.b16 %v418, %v416
    %v535 = vpack.c.b16 %v419, %v417
    %v536 = vpack.c.b16 %v422, %v420
    %v537 = vpack.c.b16 %v423, %v421
    %v538 = vpack.c.b16 %v426, %v424
    %v539 = vpack.c.b16 %v427, %v425
    %v540 = vpack.c.b16 %v430, %v428
    %v541 = vpack.c.b16 %v431, %v429
    %v542 = vpack.c.b16 %v434, %v432
    %v543 = vpack.c.b16 %v435, %v433
    %v544 = vpack.c.b16 %v438, %v436
    %v545 = vpack.c.b16 %v439, %v437
    %v546 = vpack.c.b16 %v442, %v440
    %v547 = vpack.c.b16 %v443, %v441
    %v548 = vpack.c.b16 %v446, %v444
    %v549 = vpack.c.b16 %v447, %v445
    %v550 = vpack.c.b16 %v450, %v448
    %v551 = vpack.c.b16 %v451, %v449
    %v552 = vpack.c.b16 %v454, %v452
    %v553 = vpack.c.b16 %v455, %v453
    %v554 = vpack.c.b16 %v458, %v456
    %v555 = vpack.c.b16 %v459, %v457
    %v556 = vpack.c.b16 %v462, %v460
    %v557 = vpack.c.b16 %v463, %v461
    %v558 = vpack.c.b16 %v466, %v464
    %v559 = vpack.c.b16 %v467, %v465
    %v560 = vpack.c.b16 %v470, %v468
    %v561 = vpack.c.b16 %v471, %v469
    %v562 = vpack.c.b16 %v474, %v472
    %v563 = vpack.c.b16 %v475, %v473
    %v564 = vpack.c.b16 %v478, %v476
    %v565 = vpack.c.b16 %v479, %v477
    %v566 = vpack.c.b16 %v482, %v480
    %v567 = vpack.c.b16 %v483, %v481
    %v568 = vpack.c.b16 %v486, %v484
    %v569 = vpack.c.b16 %v487, %v485
    %v570 = vpack.c.b16 %v490, %v488
    %v571 = vpack.c.b16 %v491, %v489
    %v572 = vpack.c.b16 %v494, %v492
    %v573 = vpack.c.b16 %v495, %v493
    %v574 = vpack.c.b16 %v498, %v496
    %v575 = vpack.c.b16 %v499, %v497
    %v576 = vpack.c.b16 %v502, %v500
    %v577 = vpack.c.b16 %v503, %v501
    %v578 = vpack.c.b16 %v506, %v504
    %v579 = vpack.c.b16 %v507, %v505
    %v580 = vpack.c.b16 %v510, %v508
    %v581 = vpack.c.b16 %v511, %v509
    %v582 = vpack.c.b16 %v514, %v512
    %v583 = vpack.c.b16 %v515, %v513
    %v584 = vpack.c.b16 %v518, %v516
    %v585 = vpack.c.b16 %v519, %v517
    %v586 = vpack.c.b16 %v522, %v520
    %v587 = vpack.c.b16 %v523, %v521
    %652 = vmatprep.subr.bf16.mxu0 %v525
    %653 = vmatpush1.bf16.msra.mxu0 %v524
    %654 = vmatprep.subr.bf16.mxu0 %v527
    %655 = vmatpush1.bf16.msra.mxu0 %v526
    %656 = vmatprep.subr.bf16.mxu0 %v529
    %657 = vmatpush1.bf16.msra.mxu0 %v528
    %658 = vmatprep.subr.bf16.mxu0 %v531
    %659 = vmatpush1.bf16.msra.mxu0 %v530
    %660 = vmatprep.subr.bf16.mxu0 %v533
    %661 = vmatpush1.bf16.msra.mxu0 %v532
    %662 = vmatprep.subr.bf16.mxu0 %v535
    %663 = vmatpush1.bf16.msra.mxu0 %v534
    %664 = vmatprep.subr.bf16.mxu0 %v537
    %665 = vmatpush1.bf16.msra.mxu0 %v536
    %666 = vmatprep.subr.bf16.mxu0 %v539
    %667 = vmatpush1.bf16.msra.mxu0 %v538
    %668 = vmatprep.subr.bf16.mxu0 %v541
    %669 = vmatpush1.bf16.msra.mxu0 %v540
    %670 = vmatprep.subr.bf16.mxu0 %v543
    %671 = vmatpush1.bf16.msra.mxu0 %v542
    %672 = vmatprep.subr.bf16.mxu0 %v545
    %673 = vmatpush1.bf16.msra.mxu0 %v544
    %674 = vmatprep.subr.bf16.mxu0 %v547
    %675 = vmatpush1.bf16.msra.mxu0 %v546
    %676 = vmatprep.subr.bf16.mxu0 %v549
    %677 = vmatpush1.bf16.msra.mxu0 %v548
    %678 = vmatprep.subr.bf16.mxu0 %v551
    %679 = vmatpush1.bf16.msra.mxu0 %v550
    %680 = vmatprep.subr.bf16.mxu0 %v553
    %681 = vmatpush1.bf16.msra.mxu0 %v552
    %682 = vmatprep.subr.bf16.mxu0 %v555
    %683 = vmatpush1.bf16.msra.mxu0 %v554
    %684 = vmatprep.mubr.bf16.mxu0 %v263
    %685 = vmatmul.mubr.bf16.gmra.mrb[0].mxu0 %v262
    %v686 = vpop.f32.mrb[0].mxu0
    %v687 = vadd.f32 %v331, %v686
    %v688 = vpop.f32.mrb[0].mxu0
    %v689 = vadd.f32 %v331, %v688
    %v690 = vpop.f32.mrb[0].mxu0
    %v691 = vpop.f32.mrb[0].mxu0
    %692 = vdwg.mxu0
    %693 = vmatprep.subr.bf16.mxu0 %v557
    %694 = vmatpush1.bf16.msra.mxu0 %v556
    %695 = vmatprep.subr.bf16.mxu0 %v559
    %696 = vmatpush1.bf16.msra.mxu0 %v558
    %697 = vmatprep.subr.bf16.mxu0 %v561
    %698 = vmatpush1.bf16.msra.mxu0 %v560
    %699 = vmatprep.subr.bf16.mxu0 %v563
    %700 = vmatpush1.bf16.msra.mxu0 %v562
    %701 = vmatprep.subr.bf16.mxu0 %v565
    %702 = vmatpush1.bf16.msra.mxu0 %v564
    %703 = vmatprep.subr.bf16.mxu0 %v567
    %704 = vmatpush1.bf16.msra.mxu0 %v566
    %705 = vmatprep.subr.bf16.mxu0 %v569
    %706 = vmatpush1.bf16.msra.mxu0 %v568
    %707 = vmatprep.subr.bf16.mxu0 %v571
    %708 = vmatpush1.bf16.msra.mxu0 %v570
    %709 = vmatprep.subr.bf16.mxu0 %v573
    %710 = vmatpush1.bf16.msra.mxu0 %v572
    %711 = vmatprep.subr.bf16.mxu0 %v575
    %712 = vmatpush1.bf16.msra.mxu0 %v574
    %713 = vmatprep.subr.bf16.mxu0 %v577
    %714 = vmatpush1.bf16.msra.mxu0 %v576
    %715 = vmatprep.subr.bf16.mxu0 %v579
    %716 = vmatpush1.bf16.msra.mxu0 %v578
    %717 = vmatprep.subr.bf16.mxu0 %v581
    %718 = vmatpush1.bf16.msra.mxu0 %v580
    %719 = vmatprep.subr.bf16.mxu0 %v583
    %720 = vmatpush1.bf16.msra.mxu0 %v582
    %721 = vmatprep.subr.bf16.mxu0 %v585
    %722 = vmatpush1.bf16.msra.mxu0 %v584
    %723 = vmatprep.subr.bf16.mxu0 %v587
    %724 = vmatpush1.bf16.msra.mxu0 %v586
    %725 = vmatprep.mubr.bf16.mxu0 %v265
    %726 = vmatmul.mubr.bf16.gmra.mrb[0].mxu0 %v264
    %v727 = vpop.f32.mrb[0].mxu0
    %v728 = vadd.f32 %v687, %v727
    %v729 = vpop.f32.mrb[0].mxu0
    %v730 = vadd.f32 %v689, %v729
    %v731 = vpop.f32.mrb[0].mxu0
    %v732 = vpop.f32.mrb[0].mxu0
    %733 = vdwg.mxu0
    %v734 = vmax.f32 %v728, 0.0
    %v735 = vmax.f32 %v730, 0.0
    %v736 = vpack.c.bf16 %v734, %v734
    %v737 = vpack.c.bf16 %v735, %v735
    %v738 = vld [vmem:[#allocation5] sm:$0xf]
    %v739 = vld [vmem:[#allocation5 + $0x4] sm:$0xf]
    %v740 = vld [vmem:[#allocation5 + $0x8] sm:$0xf]
    %v741 = vld [vmem:[#allocation5 + $0xc] sm:$0xf]
    %v742 = vld [vmem:[#allocation5 + $0x10] sm:$0xf]
    %v743 = vld [vmem:[#allocation5 + $0x14] sm:$0xf]
    %v744 = vld [vmem:[#allocation5 + $0x18] sm:$0xf]
    %v745 = vld [vmem:[#allocation5 + $0x1c] sm:$0xf]
    %v746 = vld [vmem:[#allocation5 + $0x20] sm:$0xf]
    %v747 = vld [vmem:[#allocation5 + $0x24] sm:$0xf]
    %v748 = vld [vmem:[#allocation5 + $0x28] sm:$0xf]
    %v749 = vld [vmem:[#allocation5 + $0x2c] sm:$0xf]
    %v750 = vld [vmem:[#allocation5 + $0x30] sm:$0xf]
    %v751 = vld [vmem:[#allocation5 + $0x34] sm:$0xf]
    %v752 = vld [vmem:[#allocation5 + $0x38] sm:$0xf]
    %v753 = vld [vmem:[#allocation5 + $0x3c] sm:$0xf]
    %v754 = vld [vmem:[#allocation5 + $0x40] sm:$0xf]
    %v755 = vld [vmem:[#allocation5 + $0x44] sm:$0xf]
    %v756 = vld [vmem:[#allocation5 + $0x48] sm:$0xf]
    %v757 = vld [vmem:[#allocation5 + $0x4c] sm:$0xf]
    %v758 = vld [vmem:[#allocation5 + $0x50] sm:$0xf]
    %v759 = vld [vmem:[#allocation5 + $0x54] sm:$0xf]
    %v760 = vld [vmem:[#allocation5 + $0x58] sm:$0xf]
    %v761 = vld [vmem:[#allocation5 + $0x5c] sm:$0xf]
    %v762 = vld [vmem:[#allocation5 + $0x60] sm:$0xf]
    %v763 = vld [vmem:[#allocation5 + $0x64] sm:$0xf]
    %v764 = vld [vmem:[#allocation5 + $0x68] sm:$0xf]
    %v765 = vld [vmem:[#allocation5 + $0x6c] sm:$0xf]
    %v766 = vld [vmem:[#allocation5 + $0x70] sm:$0xf]
    %v767 = vld [vmem:[#allocation5 + $0x74] sm:$0xf]
    %v768 = vld [vmem:[#allocation5 + $0x78] sm:$0xf]
    %v769 = vld [vmem:[#allocation5 + $0x7c] sm:$0xf]
    %v770 = vld [vmem:[%s6] sm:$0x1]
    %v772 = vlaneseq
    %v773 = vshrl.u32 %v772, 7
    %v774 = vsub.s32 0, %v773
    %v775 = vrot.slane %v770, %v774
    %v809 = vunpack.c.l.b16 %v738
    %v810 = vunpack.c.l.b16 %v739
    %v811 = vunpack.c.l.b16 %v740
    %v812 = vunpack.c.l.b16 %v741
    %v813 = vunpack.c.l.b16 %v742
    %v814 = vunpack.c.l.b16 %v743
    %v815 = vunpack.c.l.b16 %v744
    %v816 = vunpack.c.l.b16 %v745
    %v817 = vunpack.c.l.b16 %v746
    %v818 = vunpack.c.l.b16 %v747
    %v819 = vunpack.c.l.b16 %v748
    %v820 = vunpack.c.l.b16 %v749
    %v821 = vunpack.c.l.b16 %v750
    %v822 = vunpack.c.l.b16 %v751
    %v823 = vunpack.c.l.b16 %v752
    %v824 = vunpack.c.l.b16 %v753
    %v825 = vunpack.c.l.b16 %v754
    %v826 = vunpack.c.l.b16 %v755
    %v827 = vunpack.c.l.b16 %v756
    %v828 = vunpack.c.l.b16 %v757
    %v829 = vunpack.c.l.b16 %v758
    %v830 = vunpack.c.l.b16 %v759
    %v831 = vunpack.c.l.b16 %v760
    %v832 = vunpack.c.l.b16 %v761
    %v833 = vunpack.c.l.b16 %v762
    %v834 = vunpack.c.l.b16 %v763
    %v835 = vunpack.c.l.b16 %v764
    %v836 = vunpack.c.l.b16 %v765
    %v837 = vunpack.c.l.b16 %v766
    %v838 = vunpack.c.l.b16 %v767
    %v839 = vunpack.c.l.b16 %v768
    %v840 = vunpack.c.l.b16 %v769
    %v841 = vpack.c.b16 %v810, %v809
    %v842 = vpack.c.b16 %v812, %v811
    %v843 = vpack.c.b16 %v814, %v813
    %v844 = vpack.c.b16 %v816, %v815
    %v845 = vpack.c.b16 %v818, %v817
    %v846 = vpack.c.b16 %v820, %v819
    %v847 = vpack.c.b16 %v822, %v821
    %v848 = vpack.c.b16 %v824, %v823
    %v849 = vpack.c.b16 %v826, %v825
    %v850 = vpack.c.b16 %v828, %v827
    %v851 = vpack.c.b16 %v830, %v829
    %v852 = vpack.c.b16 %v832, %v831
    %v853 = vpack.c.b16 %v834, %v833
    %v854 = vpack.c.b16 %v836, %v835
    %v855 = vpack.c.b16 %v838, %v837
    %v856 = vpack.c.b16 %v840, %v839
    %873 = vmatprep.subr.bf16.mxu0 0
    %874 = vmatpush1.bf16.msra.mxu0 %v841
    %875 = vmatprep.subr.bf16.mxu0 0
    %876 = vmatpush1.bf16.msra.mxu0 %v842
    %877 = vmatprep.subr.bf16.mxu0 0
    %878 = vmatpush1.bf16.msra.mxu0 %v843
    %879 = vmatprep.subr.bf16.mxu0 0
    %880 = vmatpush1.bf16.msra.mxu0 %v844
    %881 = vmatprep.subr.bf16.mxu0 0
    %882 = vmatpush1.bf16.msra.mxu0 %v845
    %883 = vmatprep.subr.bf16.mxu0 0
    %884 = vmatpush1.bf16.msra.mxu0 %v846
    %885 = vmatprep.subr.bf16.mxu0 0
    %886 = vmatpush1.bf16.msra.mxu0 %v847
    %887 = vmatprep.subr.bf16.mxu0 0
    %888 = vmatpush1.bf16.msra.mxu0 %v848
    %889 = vmatprep.subr.bf16.mxu0 0
    %890 = vmatpush1.bf16.msra.mxu0 %v849
    %891 = vmatprep.subr.bf16.mxu0 0
    %892 = vmatpush1.bf16.msra.mxu0 %v850
    %893 = vmatprep.subr.bf16.mxu0 0
    %894 = vmatpush1.bf16.msra.mxu0 %v851
    %895 = vmatprep.subr.bf16.mxu0 0
    %896 = vmatpush1.bf16.msra.mxu0 %v852
    %897 = vmatprep.subr.bf16.mxu0 0
    %898 = vmatpush1.bf16.msra.mxu0 %v853
    %899 = vmatprep.subr.bf16.mxu0 0
    %900 = vmatpush1.bf16.msra.mxu0 %v854
    %901 = vmatprep.subr.bf16.mxu0 0
    %902 = vmatpush1.bf16.msra.mxu0 %v855
    %903 = vmatprep.subr.bf16.mxu0 0
    %904 = vmatpush1.bf16.msra.mxu0 %v856
    %905 = vmatprep.mubr.bf16.mxu0 %v737
    %906 = vmatmul.mubr.bf16.gmra.mrb[0].mxu0 %v736
    %v907 = vpop.f32.mrb[0].mxu0
    %v908 = vadd.f32 %v775, %v907
    %v909 = vpop.f32.mrb[0].mxu0
    %v910 = vpop.f32.mrb[0].mxu0
    %v911 = vpop.f32.mrb[0].mxu0
    %912 = vdwg.mxu0
    %v913 = vmax.f32 %v908, 0.0
    %v914 = vld [vmem:[%s1] sm:$0xf]
    %v915 = vld [vmem:[%s7] sm:$0xf]
    %v916 = vld [vmem:[%s8] sm:$0x1]
    %v918 = vlaneseq
    %v919 = vshrl.u32 %v918, 7
    %v920 = vsub.s32 0, %v919
    %v921 = vrot.slane %v916, %v920
    %vm923 = vcmask 64512
    %v925 = vsel %vm923, %v914, 0
    %vm927 = vcmask 1043456
    %v929 = vsel %vm927, %v915, 0
    %931 = vmatprep.subr.bf16.mxu0 0
    %932 = vmatpush1.bf16.msra.mxu0 %v929
    %933 = vmatprep.subr.bf16.mxu0 0
    %934 = vmatpush1.bf16.msra.mxu0 0
    %935 = vmatprep.subr.bf16.mxu0 0
    %936 = vmatpush1.bf16.msra.mxu0 0
    %937 = vmatprep.subr.bf16.mxu0 0
    %938 = vmatpush1.bf16.msra.mxu0 0
    %939 = vmatprep.subr.bf16.mxu0 0
    %940 = vmatpush1.bf16.msra.mxu0 0
    %941 = vmatprep.subr.bf16.mxu0 0
    %942 = vmatpush1.bf16.msra.mxu0 0
    %943 = vmatprep.subr.bf16.mxu0 0
    %944 = vmatpush1.bf16.msra.mxu0 0
    %945 = vmatprep.subr.bf16.mxu0 0
    %946 = vmatpush1.bf16.msra.mxu0 0
    %947 = vmatprep.subr.bf16.mxu0 0
    %948 = vmatpush1.bf16.msra.mxu0 0
    %949 = vmatprep.subr.bf16.mxu0 0
    %950 = vmatpush1.bf16.msra.mxu0 0
    %951 = vmatprep.subr.bf16.mxu0 0
    %952 = vmatpush1.bf16.msra.mxu0 0
    %953 = vmatprep.subr.bf16.mxu0 0
    %954 = vmatpush1.bf16.msra.mxu0 0
    %955 = vmatprep.subr.bf16.mxu0 0
    %956 = vmatpush1.bf16.msra.mxu0 0
    %957 = vmatprep.subr.bf16.mxu0 0
    %958 = vmatpush1.bf16.msra.mxu0 0
    %959 = vmatprep.subr.bf16.mxu0 0
    %960 = vmatpush1.bf16.msra.mxu0 0
    %961 = vmatprep.subr.bf16.mxu0 0
    %962 = vmatpush1.bf16.msra.mxu0 0
    %963 = vmatprep.mubr.bf16.mxu0 0
    %964 = vmatmul.mubr.bf16.gmra.mrb[0].mxu0 %v925
    %v965 = vpop.f32.mrb[0].mxu0
    %v966 = vadd.f32 %v921, %v965
    %v967 = vpop.f32.mrb[0].mxu0
    %v968 = vpop.f32.mrb[0].mxu0
    %v969 = vpop.f32.mrb[0].mxu0
    %970 = vdwg.mxu0
    %v971 = vmax.f32 %v966, 0.0
    %v972 = vpack.c.bf16 %v913, %v913
    %v973 = vld [vmem:[#allocation7] sm:$0xf]
    %v974 = vld [vmem:[#allocation7 + $0x4] sm:$0xf]
    %v975 = vld [vmem:[#allocation7 + $0x8] sm:$0xf]
    %v976 = vld [vmem:[#allocation7 + $0xc] sm:$0xf]
    %v977 = vld [vmem:[#allocation7 + $0x10] sm:$0xf]
    %v978 = vld [vmem:[#allocation7 + $0x14] sm:$0xf]
    %v979 = vld [vmem:[#allocation7 + $0x18] sm:$0xf]
    %v980 = vld [vmem:[#allocation7 + $0x1c] sm:$0xf]
    %v981 = vld [vmem:[#allocation7 + $0x20] sm:$0xf]
    %v982 = vld [vmem:[#allocation7 + $0x24] sm:$0xf]
    %v983 = vld [vmem:[#allocation7 + $0x28] sm:$0xf]
    %v984 = vld [vmem:[#allocation7 + $0x2c] sm:$0xf]
    %v985 = vld [vmem:[#allocation7 + $0x30] sm:$0xf]
    %v986 = vld [vmem:[#allocation7 + $0x34] sm:$0xf]
    %v987 = vld [vmem:[#allocation7 + $0x38] sm:$0xf]
    %v988 = vld [vmem:[#allocation7 + $0x3c] sm:$0xf]
    %v989 = vpack.c.bf16 %v971, %v971
    %v990 = vld [vmem:[#allocation8] sm:$0xf]
    %v991 = vld [vmem:[#allocation8 + $0x4] sm:$0xf]
    %v992 = vld [vmem:[#allocation8 + $0x8] sm:$0xf]
    %v993 = vld [vmem:[#allocation8 + $0xc] sm:$0xf]
    %v994 = vld [vmem:[#allocation8 + $0x10] sm:$0xf]
    %v995 = vld [vmem:[#allocation8 + $0x14] sm:$0xf]
    %v996 = vld [vmem:[#allocation8 + $0x18] sm:$0xf]
    %v997 = vld [vmem:[#allocation8 + $0x1c] sm:$0xf]
    %v998 = vld [vmem:[#allocation8 + $0x20] sm:$0xf]
    %v999 = vld [vmem:[#allocation8 + $0x24] sm:$0xf]
    %v1000 = vld [vmem:[#allocation8 + $0x28] sm:$0xf]
    %v1001 = vld [vmem:[#allocation8 + $0x2c] sm:$0xf]
    %v1002 = vld [vmem:[#allocation8 + $0x30] sm:$0xf]
    %v1003 = vld [vmem:[#allocation8 + $0x34] sm:$0xf]
    %v1004 = vld [vmem:[#allocation8 + $0x38] sm:$0xf]
    %v1005 = vld [vmem:[#allocation8 + $0x3c] sm:$0xf]
    %v1022 = vunpack.c.l.b16 %v990
    %v1023 = vunpack.c.l.b16 %v991
    %v1024 = vunpack.c.l.b16 %v992
    %v1025 = vunpack.c.l.b16 %v993
    %v1026 = vunpack.c.l.b16 %v994
    %v1027 = vunpack.c.l.b16 %v995
    %v1028 = vunpack.c.l.b16 %v996
    %v1029 = vunpack.c.l.b16 %v997
    %v1030 = vunpack.c.l.b16 %v998
    %v1031 = vunpack.c.l.b16 %v999
    %v1032 = vunpack.c.l.b16 %v1000
    %v1033 = vunpack.c.l.b16 %v1001
    %v1034 = vunpack.c.l.b16 %v1002
    %v1035 = vunpack.c.l.b16 %v1003
    %v1036 = vunpack.c.l.b16 %v1004
    %v1037 = vunpack.c.l.b16 %v1005
    %v1038 = vpack.c.b16 %v1023, %v1022
    %v1039 = vpack.c.b16 %v1025, %v1024
    %v1040 = vpack.c.b16 %v1027, %v1026
    %v1041 = vpack.c.b16 %v1029, %v1028
    %v1042 = vpack.c.b16 %v1031, %v1030
    %v1043 = vpack.c.b16 %v1033, %v1032
    %v1044 = vpack.c.b16 %v1035, %v1034
    %v1045 = vpack.c.b16 %v1037, %v1036
    %1054 = vmatprep.subr.bf16.mxu0 0
    %1055 = vmatpush1.bf16.msra.mxu0 %v1038
    %1056 = vmatprep.subr.bf16.mxu0 0
    %1057 = vmatpush1.bf16.msra.mxu0 %v1039
    %1058 = vmatprep.subr.bf16.mxu0 0
    %1059 = vmatpush1.bf16.msra.mxu0 %v1040
    %1060 = vmatprep.subr.bf16.mxu0 0
    %1061 = vmatpush1.bf16.msra.mxu0 %v1041
    %1062 = vmatprep.subr.bf16.mxu0 0
    %1063 = vmatpush1.bf16.msra.mxu0 %v1042
    %1064 = vmatprep.subr.bf16.mxu0 0
    %1065 = vmatpush1.bf16.msra.mxu0 %v1043
    %1066 = vmatprep.subr.bf16.mxu0 0
    %1067 = vmatpush1.bf16.msra.mxu0 %v1044
    %1068 = vmatprep.subr.bf16.mxu0 0
    %1069 = vmatpush1.bf16.msra.mxu0 %v1045
    %1070 = vmatprep.subr.bf16.mxu0 0
    %1071 = vmatpush1.bf16.msra.mxu0 0
    %1072 = vmatprep.subr.bf16.mxu0 0
    %1073 = vmatpush1.bf16.msra.mxu0 0
    %1074 = vmatprep.subr.bf16.mxu0 0
    %1075 = vmatpush1.bf16.msra.mxu0 0
    %1076 = vmatprep.subr.bf16.mxu0 0
    %1077 = vmatpush1.bf16.msra.mxu0 0
    %1078 = vmatprep.subr.bf16.mxu0 0
    %1079 = vmatpush1.bf16.msra.mxu0 0
    %1080 = vmatprep.subr.bf16.mxu0 0
    %1081 = vmatpush1.bf16.msra.mxu0 0
    %1082 = vmatprep.subr.bf16.mxu0 0
    %1083 = vmatpush1.bf16.msra.mxu0 0
    %1084 = vmatprep.subr.bf16.mxu0 0
    %1085 = vmatpush1.bf16.msra.mxu0 0
    %1086 = vmatprep.mubr.bf16.mxu0 0
    %1087 = vmatmul.mubr.bf16.gmra.mrb[0].mxu0 %v989
    %v1088 = vpop.f32.mrb[0].mxu0
    %v1089 = vadd.f32 0.0, %v1088
    %v1090 = vpop.f32.mrb[0].mxu0
    %v1091 = vpop.f32.mrb[0].mxu0
    %v1092 = vpop.f32.mrb[0].mxu0
    %1093 = vdwg.mxu0
    %v1110 = vunpack.c.l.b16 %v973
    %v1111 = vunpack.c.l.b16 %v974
    %v1112 = vunpack.c.l.b16 %v975
    %v1113 = vunpack.c.l.b16 %v976
    %v1114 = vunpack.c.l.b16 %v977
    %v1115 = vunpack.c.l.b16 %v978
    %v1116 = vunpack.c.l.b16 %v979
    %v1117 = vunpack.c.l.b16 %v980
    %v1118 = vunpack.c.l.b16 %v981
    %v1119 = vunpack.c.l.b16 %v982
    %v1120 = vunpack.c.l.b16 %v983
    %v1121 = vunpack.c.l.b16 %v984
    %v1122 = vunpack.c.l.b16 %v985
    %v1123 = vunpack.c.l.b16 %v986
    %v1124 = vunpack.c.l.b16 %v987
    %v1125 = vunpack.c.l.b16 %v988
    %v1126 = vpack.c.b16 %v1111, %v1110
    %v1127 = vpack.c.b16 %v1113, %v1112
    %v1128 = vpack.c.b16 %v1115, %v1114
    %v1129 = vpack.c.b16 %v1117, %v1116
    %v1130 = vpack.c.b16 %v1119, %v1118
    %v1131 = vpack.c.b16 %v1121, %v1120
    %v1132 = vpack.c.b16 %v1123, %v1122
    %v1133 = vpack.c.b16 %v1125, %v1124
    %1142 = vmatprep.subr.bf16.mxu0 0
    %1143 = vmatpush1.bf16.msra.mxu0 %v1126
    %1144 = vmatprep.subr.bf16.mxu0 0
    %1145 = vmatpush1.bf16.msra.mxu0 %v1127
    %1146 = vmatprep.subr.bf16.mxu0 0
    %1147 = vmatpush1.bf16.msra.mxu0 %v1128
    %1148 = vmatprep.subr.bf16.mxu0 0
    %1149 = vmatpush1.bf16.msra.mxu0 %v1129
    %1150 = vmatprep.subr.bf16.mxu0 0
    %1151 = vmatpush1.bf16.msra.mxu0 %v1130
    %1152 = vmatprep.subr.bf16.mxu0 0
    %1153 = vmatpush1.bf16.msra.mxu0 %v1131
    %1154 = vmatprep.subr.bf16.mxu0 0
    %1155 = vmatpush1.bf16.msra.mxu0 %v1132
    %1156 = vmatprep.subr.bf16.mxu0 0
    %1157 = vmatpush1.bf16.msra.mxu0 %v1133
    %1158 = vmatprep.subr.bf16.mxu0 0
    %1159 = vmatpush1.bf16.msra.mxu0 0
    %1160 = vmatprep.subr.bf16.mxu0 0
    %1161 = vmatpush1.bf16.msra.mxu0 0
    %1162 = vmatprep.subr.bf16.mxu0 0
    %1163 = vmatpush1.bf16.msra.mxu0 0
    %1164 = vmatprep.subr.bf16.mxu0 0
    %1165 = vmatpush1.bf16.msra.mxu0 0
    %1166 = vmatprep.subr.bf16.mxu0 0
    %1167 = vmatpush1.bf16.msra.mxu0 0
    %1168 = vmatprep.subr.bf16.mxu0 0
    %1169 = vmatpush1.bf16.msra.mxu0 0
    %1170 = vmatprep.subr.bf16.mxu0 0
    %1171 = vmatpush1.bf16.msra.mxu0 0
    %1172 = vmatprep.subr.bf16.mxu0 0
    %1173 = vmatpush1.bf16.msra.mxu0 0
    %1174 = vmatprep.mubr.bf16.mxu0 0
    %1175 = vmatmul.mubr.bf16.gmra.mrb[0].mxu0 %v972
    %v1176 = vpop.f32.mrb[0].mxu0
    %v1177 = vadd.f32 %v1089, %v1176
    %v1178 = vpop.f32.mrb[0].mxu0
    %v1179 = vpop.f32.mrb[0].mxu0
    %v1180 = vpop.f32.mrb[0].mxu0
    %1181 = vdwg.mxu0
    %v1182 = vld [vmem:[#allocation10] sm:$0x1]
    %v1184 = vlaneseq
    %v1185 = vshrl.u32 %v1184, 7
    %v1186 = vsub.s32 0, %v1185
    %v1187 = vrot.slane %v1182, %v1186
    %v1189 = vadd.f32 %v1177, %v1187
    %v1190 = vmax.f32 %v1189, 0.0
    %v1191 = vld [vmem:[%s12] sm:$0x1]
    %v1193 = vlaneseq
    %v1194 = vshrl.u32 %v1193, 7
    %v1195 = vsub.s32 0, %v1194
    %v1196 = vrot.slane %v1191, %v1195
    %v1198 = vmul.f32 %v1190, %v1196
    %1199 = vadd.xlane.f32.xlu0 %v1198
    %v1200 = vpop.xlane.xlu0 %1199
    %s1201 = sld [smem:[#allocation11 + $0x1]]
    %v1202 = vstv %s1201
    %v1203 = vadd.f32 %v1200, %v1202
    %vm1204 = vcmask 7168
    %1205 = vst.msk [vmem:[%s14] sm:$0xff] %vm1204, %v1203
    // Predicated region
    $region82: #{critic_forward.1} parent=1 // pred_check
      _
    $region83: #{critic_forward.1} parent=1 // pred_check_branch
      %1207 = sbr.rel (0) target = $region85
    $region84: #{critic_forward.1} parent=1 // pred_region
      _
    $region85: #{critic_forward.1} parent=1 // pred_fallthru
      _
    // Predicated region
    $region86: #{critic_forward.1} parent=1 // pred_check
      _
    $region87: #{critic_forward.1} parent=1 // pred_check_branch
      %1209 = sbr.rel (0) target = $region89
    $region88: #{critic_forward.1} parent=1 // pred_region
      _
    $region89: #{critic_forward.1} parent=1 // pred_fallthru
      _
    %1210 = vsyncpa [#allocation3], 1
    %1211 = vsyncpa [#allocation6], 1
    %1212 = vsyncpa [#allocation9], 1
    %1213 = vsyncpa [#allocation4], 1

</llo_original>
